<compile_context>
chip_gen: v7x
topology: tpu7x:2x2x1
jax: 0.10.0
libtpu: 0.0.40
codegen_flags: <defaults>
</compile_context>

<pallas_src>
import math

import jax
import jax.numpy as jnp
from jax import lax
from jax.experimental import pallas as pl
from jax.experimental.pallas import tpu as pltpu

LANES = 128
SUBLANES = 8
_TARGET_BLOCK_ROWS = 2048  # 2048 x 128 x 4B = 1 MiB per f32 input block


def _make_sums_kernel(block_rows, rows_total, mask_tail):
    """Kernel accumulating [sum(bce), sum(sig*t), sum(sig), sum(t)]."""
    groups = block_rows // SUBLANES  # block_rows is always a multiple of 8

    def kernel(pred_ref, target_ref, out_ref,
               acc_bce, acc_inter, acc_sig, acc_targ):
        i = pl.program_id(0)

        @pl.when(i == 0)
        def _init():
            acc_bce[...] = jnp.zeros_like(acc_bce)
            acc_inter[...] = jnp.zeros_like(acc_inter)
            acc_sig[...] = jnp.zeros_like(acc_sig)
            acc_targ[...] = jnp.zeros_like(acc_targ)

        x = pred_ref[...].astype(jnp.float32)
        z = target_ref[...].astype(jnp.float32)

        # Shared transcendentals (one exp + one log + one divide / element):
        #   BCE-with-logits (stable): max(x,0) - x*z + log1p(exp(-|x|))
        #   sigmoid(x) = 1/(1+e) for x>=0, e/(1+e) for x<0, with e = exp(-|x|)
        e = jnp.exp(-jnp.abs(x))
        inv = 1.0 / (1.0 + e)   # exact; approx reciprocal loosens tolerances
        sig = jnp.where(x >= 0, inv, e * inv)
        bce = jnp.maximum(x, 0.0) - x * z + jnp.log1p(e)

        if mask_tail:
            # Only compiled when rows_total is not a multiple of block_rows
            # (the ragged last block reads garbage rows past the array end).
            row = lax.broadcasted_iota(jnp.int32, (block_rows, LANES), 0)
            valid = (i * block_rows + row) < rows_total
            zero = jnp.zeros_like(x)
            bce = jnp.where(valid, bce, zero)
            sig = jnp.where(valid, sig, zero)
            z = jnp.where(valid, z, zero)

        def fold(v):
            # Layout-preserving: (block_rows,128) -> (groups,8,128); summing
            # the leading axis is plain vreg adds into one (8,128) tile.
            return v.reshape(groups, SUBLANES, LANES).sum(axis=0)

        acc_bce[...] += fold(bce)
        acc_inter[...] += fold(sig * z)
        acc_sig[...] += fold(sig)
        acc_targ[...] += fold(z)

        @pl.when(i == pl.num_programs(0) - 1)
        def _finalize():
            out_ref[0] = jnp.sum(acc_bce[...])
            out_ref[1] = jnp.sum(acc_inter[...])
            out_ref[2] = jnp.sum(acc_sig[...])
            out_ref[3] = jnp.sum(acc_targ[...])

    return kernel


def combined_loss1(pred, target, modle=None, alpha=0.5):
    """JAX/Pallas equivalent of CombinedLoss1.forward(pred, target, modle)."""
    del modle  # unused, matches the PyTorch signature
    n = pred.size

    # Keep native dtype (bf16 stays bf16 in HBM); cast happens in-kernel.
    pred_f = pred.reshape(-1)
    targ_f = target.reshape(-1)
    if not jnp.issubdtype(pred_f.dtype, jnp.floating):
        pred_f = pred_f.astype(jnp.float32)
    if not jnp.issubdtype(targ_f.dtype, jnp.floating):
        targ_f = targ_f.astype(jnp.float32)

    rows = -(-n // LANES)                       # ceil(n / 128)
    rows_p = -(-rows // SUBLANES) * SUBLANES    # round rows up to multiple of 8
    pad = rows_p * LANES - n
    if pad:
        # Rare path (n % 1024 != 0): minimal zero-pad to a whole (8,128) tile
        # grid; corrected analytically after the kernel.
        pred_f = jnp.pad(pred_f, (0, pad))
        targ_f = jnp.pad(targ_f, (0, pad))

    pred2 = pred_f.reshape(rows_p, LANES)
    targ2 = targ_f.reshape(rows_p, LANES)

    if rows_p <= _TARGET_BLOCK_ROWS:
        block_rows = rows_p              # single block == full extent
        num_blocks = 1
    else:
        block_rows = _TARGET_BLOCK_ROWS
        num_blocks = -(-rows_p // block_rows)
    mask_tail = (num_blocks * block_rows) != rows_p

    kernel = _make_sums_kernel(block_rows, rows_p, mask_tail)

    sums = pl.pallas_call(
        kernel,
        out_shape=jax.ShapeDtypeStruct((4,), jnp.float32),
        grid_spec=pltpu.PrefetchScalarGridSpec(
            num_scalar_prefetch=0,
            grid=(num_blocks,),
            in_specs=[
                pl.BlockSpec((block_rows, LANES), lambda i: (i, 0)),
                pl.BlockSpec((block_rows, LANES), lambda i: (i, 0)),
            ],
            out_specs=pl.BlockSpec(memory_space=pltpu.MemorySpace.SMEM),
            scratch_shapes=[
                pltpu.VMEM((SUBLANES, LANES), jnp.float32),  # bce
                pltpu.VMEM((SUBLANES, LANES), jnp.float32),  # sig * target
                pltpu.VMEM((SUBLANES, LANES), jnp.float32),  # sig
                pltpu.VMEM((SUBLANES, LANES), jnp.float32),  # target
            ],
        ),
        compiler_params=pltpu.CompilerParams(
            dimension_semantics=("arbitrary",),
            vmem_limit_bytes=32 * 1024 * 1024,
        ),
    )(pred2, targ2)

    bce_sum, inter, pred_sum, targ_sum = sums[0], sums[1], sums[2], sums[3]
    if pad:
        # Each zero-padded (logit=0, target=0) element contributes exactly
        # log(2) to the BCE sum and 0.5 to the sigmoid sum (0 elsewhere).
        bce_sum = bce_sum - jnp.float32(pad * math.log(2.0))
        pred_sum = pred_sum - jnp.float32(pad * 0.5)

    bce_loss = bce_sum / jnp.float32(n)
    dice_loss = 1.0 - (2.0 * inter + 1.0) / (pred_sum + targ_sum + 1.0)
    return alpha * bce_loss + (1.0 - alpha) * dice_loss


def _reference_loss(pred, target, alpha=0.5):
    """Pure-JAX reference mirroring the PyTorch module."""
    x = pred.astype(jnp.float32)
    z = target.astype(jnp.float32)
    bce = jnp.mean(jnp.maximum(x, 0.0) - x * z + jnp.log1p(jnp.exp(-jnp.abs(x))))
    p = jax.nn.sigmoid(x)
    dice = 1.0 - (2.0 * jnp.sum(p * z) + 1.0) / (jnp.sum(p) + jnp.sum(z) + 1.0)
    return alpha * bce + (1.0 - alpha) * dice


if __name__ == "__main__":
    key = jax.random.PRNGKey(0)
    k_pred, k_targ, k_pred2, k_targ2 = jax.random.split(key, 4)

    # pred are logits, target are binary masks — NCHW like the PyTorch module.
    pred = jax.random.normal(k_pred, (2, 4, 16, 16), dtype=jnp.float32)
    target = (jax.random.uniform(k_targ, (2, 4, 16, 16)) > 0.5).astype(jnp.float32)

    loss = combined_loss1(pred, target, modle=None, alpha=0.5)
    loss = jax.block_until_ready(loss)
    ref = _reference_loss(pred, target, alpha=0.5)
    assert jnp.allclose(loss, ref, rtol=1e-5, atol=1e-5), (loss, ref)

    # Ragged size (exercises the analytic zero-pad correction path).
    pred_r = jax.random.normal(k_pred2, (2, 3, 11, 13), dtype=jnp.float32)
    target_r = (jax.random.uniform(k_targ2, (2, 3, 11, 13)) > 0.5).astype(jnp.float32)
    loss_r = jax.block_until_ready(combined_loss1(pred_r, target_r, modle=None, alpha=0.5))
    ref_r = _reference_loss(pred_r, target_r, alpha=0.5)
    assert jnp.allclose(loss_r, ref_r, rtol=1e-5, atol=1e-5), (loss_r, ref_r)

    print("KERNEL_OK")
</pallas_src>

<mosaic_0001>
module attributes {stable_mosaic.version = 11 : i64} {
  func.func @kernel(%arg0: i32, %arg1: memref<16x128xf32, #tpu.memory_space<vmem>>, %arg2: memref<16x128xf32, #tpu.memory_space<vmem>>, %arg3: memref<4xf32, #tpu.memory_space<smem>>, %arg4: memref<8x128xf32, #tpu.memory_space<vmem>>, %arg5: memref<8x128xf32, #tpu.memory_space<vmem>>, %arg6: memref<8x128xf32, #tpu.memory_space<vmem>>, %arg7: memref<8x128xf32, #tpu.memory_space<vmem>>) attributes {dimension_semantics = [#tpu.dimension_semantics<arbitrary>], iteration_bounds = array<i64: 1>, scalar_prefetch = 0 : i64, scratch_operands = 4 : i64, tpu.core_type = #tpu.core_type<tc>, window_params = [{transform_indices = @transform_0, window_bounds = array<i64: 16, 128>}, {transform_indices = @transform_1, window_bounds = array<i64: 16, 128>}, {transform_indices = @transform_2, window_bounds = array<i64: 4>}]} {
    %c0_i32 = arith.constant 0 : i32
    %0 = arith.cmpi eq, %arg0, %c0_i32 : i32
    %1 = arith.extui %0 : i1 to i32
    %c0_i32_0 = arith.constant 0 : i32
    %2 = arith.cmpi ne, %1, %c0_i32_0 : i32
    scf.if %2 {
      %cst_30 = arith.constant 0.000000e+00 : f32
      %47 = vector.broadcast %cst_30 : f32 to vector<8x128xf32>
      %c0_31 = arith.constant 0 : index
      %c0_32 = arith.constant 0 : index
      %48 = vector.load %arg4[%c0_31, %c0_32] : memref<8x128xf32, #tpu.memory_space<vmem>>, vector<8x128xf32>
      tpu.vector_store %arg4[%c0_31, %c0_32], %47 {strides = array<i32>} : memref<8x128xf32, #tpu.memory_space<vmem>>, vector<8x128xf32>,
      %cst_33 = arith.constant 0.000000e+00 : f32
      %49 = vector.broadcast %cst_33 : f32 to vector<8x128xf32>
      %c0_34 = arith.constant 0 : index
      %c0_35 = arith.constant 0 : index
      %50 = vector.load %arg5[%c0_34, %c0_35] : memref<8x128xf32, #tpu.memory_space<vmem>>, vector<8x128xf32>
      tpu.vector_store %arg5[%c0_34, %c0_35], %49 {strides = array<i32>} : memref<8x128xf32, #tpu.memory_space<vmem>>, vector<8x128xf32>,
      %cst_36 = arith.constant 0.000000e+00 : f32
      %51 = vector.broadcast %cst_36 : f32 to vector<8x128xf32>
      %c0_37 = arith.constant 0 : index
      %c0_38 = arith.constant 0 : index
      %52 = vector.load %arg6[%c0_37, %c0_38] : memref<8x128xf32, #tpu.memory_space<vmem>>, vector<8x128xf32>
      tpu.vector_store %arg6[%c0_37, %c0_38], %51 {strides = array<i32>} : memref<8x128xf32, #tpu.memory_space<vmem>>, vector<8x128xf32>,
      %cst_39 = arith.constant 0.000000e+00 : f32
      %53 = vector.broadcast %cst_39 : f32 to vector<8x128xf32>
      %c0_40 = arith.constant 0 : index
      %c0_41 = arith.constant 0 : index
      %54 = vector.load %arg7[%c0_40, %c0_41] : memref<8x128xf32, #tpu.memory_space<vmem>>, vector<8x128xf32>
      tpu.vector_store %arg7[%c0_40, %c0_41], %53 {strides = array<i32>} : memref<8x128xf32, #tpu.memory_space<vmem>>, vector<8x128xf32>,
    } else {
    }
    %c0 = arith.constant 0 : index
    %c0_1 = arith.constant 0 : index
    %3 = vector.load %arg1[%c0, %c0_1] : memref<16x128xf32, #tpu.memory_space<vmem>>, vector<16x128xf32>
    %c0_2 = arith.constant 0 : index
    %c0_3 = arith.constant 0 : index
    %4 = vector.load %arg2[%c0_2, %c0_3] : memref<16x128xf32, #tpu.memory_space<vmem>>, vector<16x128xf32>
    %5 = math.absf %3 : vector<16x128xf32>
    %cst = arith.constant 0.000000e+00 : f32
    %6 = vector.broadcast %cst : f32 to vector<16x128xf32>
    %7 = arith.subf %6, %5 : vector<16x128xf32>
    %8 = math.exp %7 : vector<16x128xf32>
    %cst_4 = arith.constant 1.000000e+00 : f32
    %9 = vector.broadcast %cst_4 : f32 to vector<16x128xf32>
    %10 = arith.addf %9, %8 : vector<16x128xf32>
    %cst_5 = arith.constant 1.000000e+00 : f32
    %11 = vector.broadcast %cst_5 : f32 to vector<16x128xf32>
    %12 = arith.divf %11, %10 : vector<16x128xf32>
    %cst_6 = arith.constant 0.000000e+00 : f32
    %13 = vector.broadcast %cst_6 : f32 to vector<16x128xf32>
    %14 = arith.cmpf oge, %3, %13 : vector<16x128xf32>
    %15 = arith.mulf %8, %12 : vector<16x128xf32>
    %16 = arith.select %14, %12, %15 : vector<16x128xi1>, vector<16x128xf32>
    %cst_7 = arith.constant 0.000000e+00 : f32
    %17 = vector.broadcast %cst_7 : f32 to vector<16x128xf32>
    %18 = arith.maximumf %3, %17 : vector<16x128xf32>
    %19 = arith.mulf %3, %4 : vector<16x128xf32>
    %20 = arith.subf %18, %19 : vector<16x128xf32>
    %21 = math.log1p %8 : vector<16x128xf32>
    %22 = arith.addf %20, %21 : vector<16x128xf32>
    %c0_8 = arith.constant 0 : index
    %c0_9 = arith.constant 0 : index
    %23 = vector.load %arg4[%c0_8, %c0_9] : memref<8x128xf32, #tpu.memory_space<vmem>>, vector<8x128xf32>
    %24 = vector.shape_cast %22 : vector<16x128xf32> to vector<2x8x128xf32>
    %cst_10 = arith.constant dense<0.000000e+00> : vector<8x128xf32>
    %25 = vector.multi_reduction <add>, %24, %cst_10 [0] : vector<2x8x128xf32> to vector<8x128xf32>
    %26 = arith.addf %23, %25 : vector<8x128xf32>
    %c0_11 = arith.constant 0 : index
    %c0_12 = arith.constant 0 : index
    %27 = vector.load %arg4[%c0_11, %c0_12] : memref<8x128xf32, #tpu.memory_space<vmem>>, vector<8x128xf32>
    tpu.vector_store %arg4[%c0_11, %c0_12], %26 {strides = array<i32>} : memref<8x128xf32, #tpu.memory_space<vmem>>, vector<8x128xf32>,
    %c0_13 = arith.constant 0 : index
    %c0_14 = arith.constant 0 : index
    %28 = vector.load %arg5[%c0_13, %c0_14] : memref<8x128xf32, #tpu.memory_space<vmem>>, vector<8x128xf32>
    %29 = arith.mulf %16, %4 : vector<16x128xf32>
    %30 = vector.shape_cast %29 : vector<16x128xf32> to vector<2x8x128xf32>
    %cst_15 = arith.constant dense<0.000000e+00> : vector<8x128xf32>
    %31 = vector.multi_reduction <add>, %30, %cst_15 [0] : vector<2x8x128xf32> to vector<8x128xf32>
    %32 = arith.addf %28, %31 : vector<8x128xf32>
    %c0_16 = arith.constant 0 : index
    %c0_17 = arith.constant 0 : index
    %33 = vector.load %arg5[%c0_16, %c0_17] : memref<8x128xf32, #tpu.memory_space<vmem>>, vector<8x128xf32>
    tpu.vector_store %arg5[%c0_16, %c0_17], %32 {strides = array<i32>} : memref<8x128xf32, #tpu.memory_space<vmem>>, vector<8x128xf32>,
    %c0_18 = arith.constant 0 : index
    %c0_19 = arith.constant 0 : index
    %34 = vector.load %arg6[%c0_18, %c0_19] : memref<8x128xf32, #tpu.memory_space<vmem>>, vector<8x128xf32>
    %35 = vector.shape_cast %16 : vector<16x128xf32> to vector<2x8x128xf32>
    %cst_20 = arith.constant dense<0.000000e+00> : vector<8x128xf32>
    %36 = vector.multi_reduction <add>, %35, %cst_20 [0] : vector<2x8x128xf32> to vector<8x128xf32>
    %37 = arith.addf %34, %36 : vector<8x128xf32>
    %c0_21 = arith.constant 0 : index
    %c0_22 = arith.constant 0 : index
    %38 = vector.load %arg6[%c0_21, %c0_22] : memref<8x128xf32, #tpu.memory_space<vmem>>, vector<8x128xf32>
    tpu.vector_store %arg6[%c0_21, %c0_22], %37 {strides = array<i32>} : memref<8x128xf32, #tpu.memory_space<vmem>>, vector<8x128xf32>,
    %c0_23 = arith.constant 0 : index
    %c0_24 = arith.constant 0 : index
    %39 = vector.load %arg7[%c0_23, %c0_24] : memref<8x128xf32, #tpu.memory_space<vmem>>, vector<8x128xf32>
    %40 = vector.shape_cast %4 : vector<16x128xf32> to vector<2x8x128xf32>
    %cst_25 = arith.constant dense<0.000000e+00> : vector<8x128xf32>
    %41 = vector.multi_reduction <add>, %40, %cst_25 [0] : vector<2x8x128xf32> to vector<8x128xf32>
    %42 = arith.addf %39, %41 : vector<8x128xf32>
    %c0_26 = arith.constant 0 : index
    %c0_27 = arith.constant 0 : index
    %43 = vector.load %arg7[%c0_26, %c0_27] : memref<8x128xf32, #tpu.memory_space<vmem>>, vector<8x128xf32>
    tpu.vector_store %arg7[%c0_26, %c0_27], %42 {strides = array<i32>} : memref<8x128xf32, #tpu.memory_space<vmem>>, vector<8x128xf32>,
    %c0_i32_28 = arith.constant 0 : i32
    %44 = arith.cmpi eq, %arg0, %c0_i32_28 : i32
    %45 = arith.extui %44 : i1 to i32
    %c0_i32_29 = arith.constant 0 : i32
    %46 = arith.cmpi ne, %45, %c0_i32_29 : i32
    scf.if %46 {
      %c0_30 = arith.constant 0 : index
      %c0_31 = arith.constant 0 : index
      %47 = vector.load %arg4[%c0_30, %c0_31] : memref<8x128xf32, #tpu.memory_space<vmem>>, vector<8x128xf32>
      %48 = vector.shape_cast %47 : vector<8x128xf32> to vector<1x8x128xf32>
      %cst_32 = arith.constant dense<0.000000e+00> : vector<1xf32>
      %49 = vector.multi_reduction <add>, %48, %cst_32 [1, 2] : vector<1x8x128xf32> to vector<1xf32>
      %50 = vector.shape_cast %49 : vector<1xf32> to vector<1x1x1xf32>
      %51 = vector.extract %50[0, 0, 0] : f32 from vector<1x1x1xf32>
      %c0_33 = arith.constant 0 : index
      %52 = memref.load %arg3[%c0_33] : memref<4xf32, #tpu.memory_space<smem>>
      memref.store %51, %arg3[%c0_33] : memref<4xf32, #tpu.memory_space<smem>>
      %c0_34 = arith.constant 0 : index
      %c0_35 = arith.constant 0 : index
      %53 = vector.load %arg5[%c0_34, %c0_35] : memref<8x128xf32, #tpu.memory_space<vmem>>, vector<8x128xf32>
      %54 = vector.shape_cast %53 : vector<8x128xf32> to vector<1x8x128xf32>
      %cst_36 = arith.constant dense<0.000000e+00> : vector<1xf32>
      %55 = vector.multi_reduction <add>, %54, %cst_36 [1, 2] : vector<1x8x128xf32> to vector<1xf32>
      %56 = vector.shape_cast %55 : vector<1xf32> to vector<1x1x1xf32>
      %57 = vector.extract %56[0, 0, 0] : f32 from vector<1x1x1xf32>
      %c1 = arith.constant 1 : index
      %58 = memref.load %arg3[%c1] : memref<4xf32, #tpu.memory_space<smem>>
      memref.store %57, %arg3[%c1] : memref<4xf32, #tpu.memory_space<smem>>
      %c0_37 = arith.constant 0 : index
      %c0_38 = arith.constant 0 : index
      %59 = vector.load %arg6[%c0_37, %c0_38] : memref<8x128xf32, #tpu.memory_space<vmem>>, vector<8x128xf32>
      %60 = vector.shape_cast %59 : vector<8x128xf32> to vector<1x8x128xf32>
      %cst_39 = arith.constant dense<0.000000e+00> : vector<1xf32>
      %61 = vector.multi_reduction <add>, %60, %cst_39 [1, 2] : vector<1x8x128xf32> to vector<1xf32>
      %62 = vector.shape_cast %61 : vector<1xf32> to vector<1x1x1xf32>
      %63 = vector.extract %62[0, 0, 0] : f32 from vector<1x1x1xf32>
      %c2 = arith.constant 2 : index
      %64 = memref.load %arg3[%c2] : memref<4xf32, #tpu.memory_space<smem>>
      memref.store %63, %arg3[%c2] : memref<4xf32, #tpu.memory_space<smem>>
      %c0_40 = arith.constant 0 : index
      %c0_41 = arith.constant 0 : index
      %65 = vector.load %arg7[%c0_40, %c0_41] : memref<8x128xf32, #tpu.memory_space<vmem>>, vector<8x128xf32>
      %66 = vector.shape_cast %65 : vector<8x128xf32> to vector<1x8x128xf32>
      %cst_42 = arith.constant dense<0.000000e+00> : vector<1xf32>
      %67 = vector.multi_reduction <add>, %66, %cst_42 [1, 2] : vector<1x8x128xf32> to vector<1xf32>
      %68 = vector.shape_cast %67 : vector<1xf32> to vector<1x1x1xf32>
      %69 = vector.extract %68[0, 0, 0] : f32 from vector<1x1x1xf32>
      %c3 = arith.constant 3 : index
      %70 = memref.load %arg3[%c3] : memref<4xf32, #tpu.memory_space<smem>>
      memref.store %69, %arg3[%c3] : memref<4xf32, #tpu.memory_space<smem>>
    } else {
    }
    return
  }
  func.func @transform_0(%arg0: i32) -> (i32, i32) {
    %c0_i32 = arith.constant 0 : i32
    %c0_i32_0 = arith.constant 0 : i32
    return %arg0, %c0_i32 : i32, i32
  }
  func.func @transform_1(%arg0: i32) -> (i32, i32) {
    %c0_i32 = arith.constant 0 : i32
    %c0_i32_0 = arith.constant 0 : i32
    return %arg0, %c0_i32 : i32, i32
  }
  func.func @transform_2(%arg0: i32) -> i32 {
    %c0_i32 = arith.constant 0 : i32
    %c0_i32_0 = arith.constant 0 : i32
    return %c0_i32 : i32
  }
}

</mosaic_0001>

<llo_original>
// kernel: tpu_custom_call.1
$region0: #{tpu_custom_call.1}
  #allocation0 [shape = 'u32[]', space=smem, size = 0x4, offset = 0x4, fixed_abs, tag = 'smem constant byte address 0x4 - core index']
  #allocation1 [shape = 'u32[144,128]{1,0:T(1,128)}', space=vmem, size = 0x12000, scoped, tag = 'internal scratch']
  #allocation2 [shape = 'f32[8,128]{1,0:T(8,128)}', space=vmem, size = 0x1000, scoped, tag = 'scratch operand']
  #allocation3 [shape = 'f32[8,128]{1,0:T(8,128)}', space=vmem, size = 0x1000, scoped, tag = 'scratch operand']
  #allocation4 [shape = 'f32[8,128]{1,0:T(8,128)}', space=vmem, size = 0x1000, scoped, tag = 'scratch operand']
  #allocation5 [shape = 'f32[8,128]{1,0:T(8,128)}', space=vmem, size = 0x1000, scoped, tag = 'scratch operand']
  %s0 = inlined_call_operand.hbm [shape: f32[16,128], index: 0, kind: input, shape index: {}]
  %s1 = inlined_call_operand.hbm [shape: f32[16,128], index: 1, kind: input, shape index: {}]
  %s2 = inlined_call_operand.hbm [shape: f32[4], index: 2, kind: output, shape index: {}]
  %s3 = sld [smem:[#allocation0]]
  $region34: #{tpu_custom_call.1} parent=0
    _
  %s5 = ssub.s32 1, %s3
  %s6 = scalar_select 0, %s5, %s3
  $region1: #{tpu_custom_call.1} parent=0
    #allocation6 [shape = 'u8[8192]{0}', space=vmem, size = 0x2000, scoped, tag = 'input window, operand 0, single buffered']
    #allocation7 [shape = 's32[1]{0}', space=sflag, size = 0x4, scoped, tag = 'scoped memory for tpu_custom_call.1']
    #allocation8 [shape = 's32[1]{0}', space=sflag, size = 0x4, scoped, tag = 'scoped memory for tpu_custom_call.1']
    #allocation9 [shape = 'u8[8192]{0}', space=vmem, size = 0x2000, scoped, tag = 'input window, operand 1, single buffered']
    #allocation10 [shape = 's32[1]{0}', space=sflag, size = 0x4, scoped, tag = 'scoped memory for tpu_custom_call.1']
    #allocation11 [shape = 'u8[512]{0}', space=smem, size = 0x200, scoped, tag = 'output window, operand 0, single buffered']
    %7 = vsyncpa [#allocation7], 0
    %8 = vsyncpa [#allocation10], 0
    %9 = vsyncpa [#allocation8], 0
    // Predicated region
    $region2: #{tpu_custom_call.1} parent=1 // pred_check
      _
    $region3: #{tpu_custom_call.1} parent=1 // pred_check_branch
      %11 = sbr.rel (0) target = $region5
    $region4: #{tpu_custom_call.1} parent=1 // pred_region
      %s13 = ssub.s32 256, 256
      %14 = vsyncadd [#allocation7], %s13
      %s15 = sshll.u32 [#allocation6], 4
      %s16 = int_to_ptr.vmem [resolvable:$true] %s15
      %21 = dma.hbm_to_vmem [thread:$0]  %s0, 256, %s16, [#allocation7], 128, 128, 8
    $region5: #{tpu_custom_call.1} parent=1 // pred_fallthru
      _
    // Predicated region
    $region6: #{tpu_custom_call.1} parent=1 // pred_check
      _
    $region7: #{tpu_custom_call.1} parent=1 // pred_check_branch
      %23 = sbr.rel (0) target = $region9
    $region8: #{tpu_custom_call.1} parent=1 // pred_region
      %s25 = ssub.s32 256, 256
      %26 = vsyncadd [#allocation10], %s25
      %s27 = sshll.u32 [#allocation9], 4
      %s28 = int_to_ptr.vmem [resolvable:$true] %s27
      %33 = dma.hbm_to_vmem [thread:$0]  %s1, 256, %s28, [#allocation10], 128, 128, 8
    $region9: #{tpu_custom_call.1} parent=1 // pred_fallthru
      _
    // Predicated region
    $region10: #{tpu_custom_call.1} parent=1 // pred_check
      _
    $region11: #{tpu_custom_call.1} parent=1 // pred_check_branch
      %35 = sbr.rel (0) target = $region13
    $region12: #{tpu_custom_call.1} parent=1 // pred_region
      %36 = dma.done [#allocation7], 256
    $region13: #{tpu_custom_call.1} parent=1 // pred_fallthru
      _
    // Predicated region
    $region14: #{tpu_custom_call.1} parent=1 // pred_check
      _
    $region15: #{tpu_custom_call.1} parent=1 // pred_check_branch
      %38 = sbr.rel (0) target = $region17
    $region16: #{tpu_custom_call.1} parent=1 // pred_region
      %39 = dma.done [#allocation10], 256
    $region17: #{tpu_custom_call.1} parent=1 // pred_fallthru
      _
    %p40 = scmp.eq.s32.totalorder 0, 0
    // Predicated region
    $region18: #{tpu_custom_call.1} parent=1 // pred_check
      %p41 = pneg %p40
    $region19: #{tpu_custom_call.1} parent=1 // pred_check_branch
      %43 = sbr.rel (%p41) target = $region21
    $region20: #{tpu_custom_call.1} parent=1 // pred_region
      %44 = vst [vmem:[#allocation2] sm:$0xff] 0.0
      %45 = vst [vmem:[#allocation3] sm:$0xff] 0.0
      %46 = vst [vmem:[#allocation4] sm:$0xff] 0.0
      %47 = vst [vmem:[#allocation5] sm:$0xff] 0.0
    $region21: #{tpu_custom_call.1} parent=1 // pred_fallthru
      _
    %v48 = vld [vmem:[#allocation6] sm:$0xff]
    %v49 = vld [vmem:[#allocation6 + $0x8] sm:$0xff]
    %v50 = vld [vmem:[#allocation9] sm:$0xff]
    %v51 = vld [vmem:[#allocation9 + $0x8] sm:$0xff]
    %v52 = vand.u32 2147483647, %v48
    %v53 = vand.u32 2147483647, %v49
    %v54 = vsub.f32 0.0, %v52
    %v55 = vsub.f32 0.0, %v53
    %v56 = vmul.f32 %v54, 1.442695
    %v57 = vpow.pop %v56
    %v58 = vmul.f32 %v55, 1.442695
    %v59 = vpow.pop %v58
    %v60 = vadd.f32 %v57, 1.0
    %v61 = vadd.f32 %v59, 1.0
    %v62 = vrcp.pop %v60
    %v63 = vmul.f32 1.0, %v62
    %v64 = vrcp.pop %v61
    %v65 = vmul.f32 1.0, %v64
    %vm66 = vcmp.ge.f32.partialorder %v48, 0.0
    %vm67 = vcmp.ge.f32.partialorder %v49, 0.0
    %v68 = vmul.f32 %v57, %v63
    %v69 = vmul.f32 %v59, %v65
    %v70 = vsel %vm66, %v63, %v68
    %v71 = vsel %vm67, %v65, %v69
    %v72 = vmax.f32 %v48, 0.0
    %v73 = vmax.f32 %v49, 0.0
    %v74 = vmul.f32 %v48, %v50
    %v75 = vmul.f32 %v49, %v51
    %v76 = vsub.f32 %v72, %v74
    %v77 = vsub.f32 %v73, %v75
    %v78 = vadd.f32 %v57, 1.0
    %v79 = vlog2.pop %v78
    %v80 = vmul.f32 %v79, 0.6931472
    %v81 = vmul.f32 -0.5, %v57
    %v82 = vadd.f32 %v81, 1.0
    %v83 = vmul.f32 %v82, %v57
    %v84 = vand.u32 2147483647, %v57
    %vm85 = vcmp.lt.f32.partialorder %v84, 0.0004427343
    %v86 = vsel %vm85, %v83, %v80
    %v87 = vadd.f32 %v59, 1.0
    %v88 = vlog2.pop %v87
    %v89 = vmul.f32 %v88, 0.6931472
    %v90 = vmul.f32 -0.5, %v59
    %v91 = vadd.f32 %v90, 1.0
    %v92 = vmul.f32 %v91, %v59
    %v93 = vand.u32 2147483647, %v59
    %vm94 = vcmp.lt.f32.partialorder %v93, 0.0004427343
    %v95 = vsel %vm94, %v92, %v89
    %v96 = vadd.f32 %v76, %v86
    %v97 = vadd.f32 %v77, %v95
    %v98 = vld [vmem:[#allocation2] sm:$0xff]
    %v99 = vadd.f32 %v96, %v97
    %v100 = vadd.f32 %v98, %v99
    %101 = vst [vmem:[#allocation2] sm:$0xff] %v100
    %v102 = vld [vmem:[#allocation3] sm:$0xff]
    %v103 = vmul.f32 %v70, %v50
    %v104 = vmul.f32 %v71, %v51
    %v105 = vadd.f32 %v103, %v104
    %v106 = vadd.f32 %v102, %v105
    %107 = vst [vmem:[#allocation3] sm:$0xff] %v106
    %v108 = vld [vmem:[#allocation4] sm:$0xff]
    %v109 = vadd.f32 %v70, %v71
    %v110 = vadd.f32 %v108, %v109
    %111 = vst [vmem:[#allocation4] sm:$0xff] %v110
    %v112 = vld [vmem:[#allocation5] sm:$0xff]
    %v113 = vadd.f32 %v50, %v51
    %v114 = vadd.f32 %v112, %v113
    %115 = vst [vmem:[#allocation5] sm:$0xff] %v114
    // Predicated region
    $region22: #{tpu_custom_call.1} parent=1 // pred_check
      %p116 = pneg %p40
    $region23: #{tpu_custom_call.1} parent=1 // pred_check_branch
      %118 = sbr.rel (%p116) target = $region25
    $region24: #{tpu_custom_call.1} parent=1 // pred_region
      %v119 = vld [vmem:[#allocation2] sm:$0xff]
      %120 = vadd.xlane.f32.xlu0 %v119
      %v121 = vpop.xlane.xlu0 %120
      %v122 = vrot.slane %v121, 4
      %v123 = vadd.f32 %v121, %v122
      %v124 = vrot.slane %v123, 2
      %v125 = vadd.f32 %v123, %v124
      %v126 = vrot.slane %v125, 1
      %v127 = vadd.f32 %v125, %v126
      %s128 = vtos %v127
      %s129 = scalar_lea.smem [#allocation11], 0
      %130 = sst [smem:[%s129]] %s128
      %v131 = vld [vmem:[#allocation3] sm:$0xff]
      %132 = vadd.xlane.f32.xlu0 %v131
      %v133 = vpop.xlane.xlu0 %132
      %v134 = vrot.slane %v133, 4
      %v135 = vadd.f32 %v133, %v134
      %v136 = vrot.slane %v135, 2
      %v137 = vadd.f32 %v135, %v136
      %v138 = vrot.slane %v137, 1
      %v139 = vadd.f32 %v137, %v138
      %s140 = vtos %v139
      %s141 = scalar_lea.smem [#allocation11], 1
      %142 = sst [smem:[%s141]] %s140
      %v143 = vld [vmem:[#allocation4] sm:$0xff]
      %144 = vadd.xlane.f32.xlu0 %v143
      %v145 = vpop.xlane.xlu0 %144
      %v146 = vrot.slane %v145, 4
      %v147 = vadd.f32 %v145, %v146
      %v148 = vrot.slane %v147, 2
      %v149 = vadd.f32 %v147, %v148
      %v150 = vrot.slane %v149, 1
      %v151 = vadd.f32 %v149, %v150
      %s152 = vtos %v151
      %s153 = scalar_lea.smem [#allocation11], 2
      %154 = sst [smem:[%s153]] %s152
      %v155 = vld [vmem:[#allocation5] sm:$0xff]
      %156 = vadd.xlane.f32.xlu0 %v155
      %v157 = vpop.xlane.xlu0 %156
      %v158 = vrot.slane %v157, 4
      %v159 = vadd.f32 %v157, %v158
      %v160 = vrot.slane %v159, 2
      %v161 = vadd.f32 %v159, %v160
      %v162 = vrot.slane %v161, 1
      %v163 = vadd.f32 %v161, %v162
      %s164 = vtos %v163
      %s165 = scalar_lea.smem [#allocation11], 3
      %166 = sst [smem:[%s165]] %s164
    $region25: #{tpu_custom_call.1} parent=1 // pred_fallthru
      _
    // Predicated region
    $region26: #{tpu_custom_call.1} parent=1 // pred_check
      _
    $region27: #{tpu_custom_call.1} parent=1 // pred_check_branch
      %168 = sbr.rel (0) target = $region29
    $region28: #{tpu_custom_call.1} parent=1 // pred_region
      %s170 = ssub.s32 16, 16
      %171 = vsyncadd [#allocation8], %s170
      %174 = dma.smem_to_hbm [#allocation11], 16, %s2, [#allocation8]
    $region29: #{tpu_custom_call.1} parent=1 // pred_fallthru
      _
    // Predicated region
    $region30: #{tpu_custom_call.1} parent=1 // pred_check
      _
    $region31: #{tpu_custom_call.1} parent=1 // pred_check_branch
      %176 = sbr.rel (0) target = $region33
    $region32: #{tpu_custom_call.1} parent=1 // pred_region
      %177 = dma.done [#allocation8], 16
    $region33: #{tpu_custom_call.1} parent=1 // pred_fallthru
      _
    %178 = sfence
    %179 = vsyncpa [#allocation7], 1
    %180 = vsyncpa [#allocation10], 1
    %181 = vsyncpa [#allocation8], 1

</llo_original>
